<compile_context>
chip_gen: v7x
topology: tpu7x:2x2x1
jax: 0.10.0
libtpu: 0.0.40
codegen_flags: <defaults>
</compile_context>

<pallas_src>
import functools

import jax
import jax.numpy as jnp
from jax.experimental import pallas as pl
from jax.experimental.pallas import tpu as pltpu


def _round_up(a, b):
    return (a + b - 1) // b * b


def _cdiv(a, b):
    return -(-a // b)


_HAS_BUFFERED = hasattr(pl, "Buffered")


def _spec(shape, index_map, buffers):
    """BlockSpec with explicit pipeline depth when the jax version supports it."""
    if _HAS_BUFFERED:
        return pl.BlockSpec(shape, index_map, pipeline_mode=pl.Buffered(buffers))
    return pl.BlockSpec(shape, index_map)


def _patch_embed_kernel(x_ref, w_ref, b_ref, o_ref):
    # x_ref: (tm, K) patch rows, w_ref: (K, N) flattened conv weight,
    # b_ref: (1, N) f32 bias, o_ref: (tm, N) output tile.
    acc = jnp.dot(x_ref[...], w_ref[...], preferred_element_type=jnp.float32)
    o_ref[...] = (acc + b_ref[...]).astype(o_ref.dtype)  # f32 epilogue, cast on store


def _vmem_capacity_bytes():
    try:
        return int(pltpu.get_tpu_info().vmem_capacity_bytes)
    except Exception:
        return 64 * 1024 * 1024  # conservative: v7x per-core VMEM


def _choose_m_tiling(M, tm_cap):
    """Pick (tm_eff, grid_m): even grid for v7x core balance, minimal zero-row pad."""
    if M <= 512:
        return max(_round_up(M, 16), 16), 1          # one small tile, minimal pad
    best = None
    g0 = max(2, _cdiv(M, tm_cap))
    g0 += g0 % 2                                     # even grid -> both v7x cores busy
    for g in range(g0, g0 + 16, 2):
        for align in (256, 128):                     # prefer full-MXU rows at equal pad
            tm_ = _round_up(_cdiv(M, g), align)
            if tm_ > tm_cap:
                continue
            key = (tm_ * g - M, g, 0 if align == 256 else 1)
            if best is None or key < best[0]:
                best = (key, tm_, g)
    if best is None:                                 # degenerate corner case
        tm_ = max(min(tm_cap, 256), 16)
        return tm_, _cdiv(M, tm_)
    return best[1], best[2]


def patch_embed_forward(x, weight, bias, patch_size, *, tm=1024,
                        compute_dtype=jnp.bfloat16, out_dtype=None):
    """x:      (B, C, H, W) NCHW (PyTorch convention)
       weight: (embed_dim, C, pH, pW)  (Conv2d OIHW layout)
       bias:   (embed_dim,)
       returns (B, num_patches, embed_dim).
       Use compute_dtype=jnp.float32 for bit-closer parity with PyTorch (the
       kernel is memory-bound, so the MXU cost of f32 is hidden)."""
    B, C, H, W = x.shape
    pH, pW = patch_size
    assert H % pH == 0 and W % pW == 0
    gh, gw = H // pH, W // pW
    num_patches = gh * gw
    E = weight.shape[0]
    K = C * pH * pW
    M = B * num_patches
    out_dtype = x.dtype if out_dtype is None else out_dtype

    # --- layout glue: cast FIRST (halves bytes of any materialized copy), then
    #     extract non-overlapping patches and flatten (c, kh, kw). ---
    xp = x.astype(compute_dtype).reshape(B, C, gh, pH, gw, pW)
    xp = jnp.transpose(xp, (0, 2, 4, 1, 3, 5)).reshape(M, K)

    # --- flatten conv weight to (K, E), bias to (1, E) f32 ---
    w2d = weight.reshape(E, K).T.astype(compute_dtype)   # (K, E)
    b2d = bias.astype(jnp.float32).reshape(1, E)          # (1, E), f32 epilogue

    # --- pad N to a multiple of 128 -> lane-dense (unmasked) output stores ---
    N_pad = _round_up(E, 128)
    if N_pad != E:
        w2d = jnp.pad(w2d, ((0, 0), (0, N_pad - E)))
        b2d = jnp.pad(b2d, ((0, 0), (0, N_pad - E)))

    c_bytes = jnp.dtype(compute_dtype).itemsize
    o_bytes = jnp.dtype(out_dtype).itemsize

    # --- generation-aware VMEM budget (v5e/v6e: 128 MiB, v7x: 64 MiB/core) ---
    vmem_cap = _vmem_capacity_bytes()
    budget = (vmem_cap * 3) // 4            # ~96 MiB on v5e/v6e, ~48 MiB on v7x
    margin = 4 * 1024 * 1024                # Mosaic internal scratch headroom

    resident = K * N_pad * c_bytes + N_pad * 4          # single-buffered weight + bias

    def vmem_usage(tm_rows, in_bufs):
        return (resident + margin
                + in_bufs * tm_rows * K * c_bytes        # streamed patch rows
                + 2 * tm_rows * N_pad * o_bytes          # double-buffered output
                + tm_rows * N_pad * 4)                   # f32 acc / epilogue temp

    per_row = 2 * K * c_bytes + 2 * N_pad * o_bytes + N_pad * 4
    tm_cap = (budget - resident - margin) // per_row
    tm_cap = max(256, (min(tm_cap, tm) // 256) * 256)

    tm_eff, grid_m = _choose_m_tiling(M, tm_cap)
    M_pad = tm_eff * grid_m
    if M_pad != M:
        xp = jnp.pad(xp, ((0, M_pad - M), (0, 0)))       # zero rows -> harmless

    # --- pipeline depth on the streamed input: 3rd buffer when VMEM allows ---
    if grid_m == 1:
        in_bufs = 1
    elif grid_m > 2 and vmem_usage(tm_eff, 3) <= budget:
        in_bufs = 3
    else:
        in_bufs = 2

    vmem_limit = int(min(max(vmem_usage(tm_eff, in_bufs), 16 * 1024 * 1024),
                         (vmem_cap * 95) // 100))

    cost = pl.CostEstimate(
        flops=2 * M * K * E + M * E,                     # matmul + bias (unpadded)
        transcendentals=0,
        bytes_accessed=(M * K * c_bytes + K * E * c_bytes + E * 4
                        + M * E * o_bytes),
    )

    out = pl.pallas_call(
        _patch_embed_kernel,
        out_shape=jax.ShapeDtypeStruct((M_pad, N_pad), out_dtype),
        grid_spec=pltpu.PrefetchScalarGridSpec(
            num_scalar_prefetch=0,
            grid=(grid_m,),
            in_specs=[
                _spec((tm_eff, K), lambda i: (i, 0), in_bufs),  # streamed patch rows
                _spec((K, N_pad), lambda i: (0, 0), 1),         # resident weight
                _spec((1, N_pad), lambda i: (0, 0), 1),         # resident bias
            ],
            out_specs=pl.BlockSpec((tm_eff, N_pad), lambda i: (i, 0)),
        ),
        compiler_params=pltpu.CompilerParams(
            dimension_semantics=("parallel",),
            vmem_limit_bytes=vmem_limit,
            allow_input_fusion=[True, False, False],
        ),
        cost_estimate=cost,
    )(xp, w2d, b2d)

    if M_pad != M or N_pad != E:
        out = out[:M, :E]                 # only pay the slice when we padded
    return out.reshape(B, num_patches, E)


def _reference(x, weight, bias, patch_size):
    """Pure-JAX reference (equivalent to the PyTorch strided conv + flatten)."""
    out = jax.lax.conv_general_dilated(
        x, weight,
        window_strides=patch_size, padding="VALID",
        dimension_numbers=("NCHW", "OIHW", "NCHW"),
    ) + bias.reshape(1, -1, 1, 1)
    B, E, gh, gw = out.shape
    return jnp.transpose(out.reshape(B, E, gh * gw), (0, 2, 1))


if __name__ == "__main__":
    # Small shapes consistent with PatchEmbed: img_size=16, patch_size=4,
    # in_chans=4, embed_dim=32  -> num_patches = 16.
    B, C, H, W = 2, 4, 16, 16
    patch_size = (4, 4)
    embed_dim = 32

    key = jax.random.PRNGKey(0)
    kx, kw, kb = jax.random.split(key, 3)
    x = jax.random.normal(kx, (B, C, H, W), dtype=jnp.float32)
    weight = 0.02 * jax.random.normal(
        kw, (embed_dim, C, patch_size[0], patch_size[1]), dtype=jnp.float32)
    bias = 0.01 * jax.random.normal(kb, (embed_dim,), dtype=jnp.float32)

    fwd = jax.jit(functools.partial(patch_embed_forward, patch_size=patch_size))
    out = jax.block_until_ready(fwd(x, weight, bias))

    ref = _reference(x, weight, bias, patch_size)
    assert out.shape == (B, (H // patch_size[0]) * (W // patch_size[1]), embed_dim)
    # bf16 matmul inputs with f32 accumulation: tolerance sized for bf16 rounding.
    assert jnp.allclose(out, ref, atol=2e-2, rtol=2e-2), "mismatch vs reference"

    print("KERNEL_OK")
</pallas_src>

<mosaic_0001>
module attributes {stable_mosaic.version = 11 : i64} {
  func.func @_patch_embed_kernel(%arg0: i32, %arg1: memref<32x64xbf16, #tpu.memory_space<vmem>>, %arg2: memref<64x128xbf16, #tpu.memory_space<vmem>>, %arg3: memref<1x128xf32, #tpu.memory_space<vmem>>, %arg4: memref<32x128xf32, #tpu.memory_space<vmem>>) attributes {dimension_semantics = [#tpu.dimension_semantics<parallel>], iteration_bounds = array<i64: 1>, scalar_prefetch = 0 : i64, scratch_operands = 0 : i64, tpu.core_type = #tpu.core_type<tc>, window_params = [{pipeline_mode = #tpu.pipeline_mode<synchronous>, transform_indices = @transform_0, window_bounds = array<i64: 32, 64>}, {pipeline_mode = #tpu.pipeline_mode<synchronous>, transform_indices = @transform_1, window_bounds = array<i64: 64, 128>}, {pipeline_mode = #tpu.pipeline_mode<synchronous>, transform_indices = @transform_2, window_bounds = array<i64: 1, 128>}, {transform_indices = @transform_3, window_bounds = array<i64: 32, 128>}]} {
    %c0 = arith.constant 0 : index
    %c0_0 = arith.constant 0 : index
    %0 = vector.load %arg1[%c0, %c0_0] : memref<32x64xbf16, #tpu.memory_space<vmem>>, vector<32x64xbf16>
    %c0_1 = arith.constant 0 : index
    %c0_2 = arith.constant 0 : index
    %1 = vector.load %arg2[%c0_1, %c0_2] : memref<64x128xbf16, #tpu.memory_space<vmem>>, vector<64x128xbf16>
    %cst = arith.constant dense<0.000000e+00> : vector<32x128xf32>
    %2 = tpu.matmul %0, %1, %cst {dimension_numbers = #tpu.dot_dimension_numbers<[1], [0], [0], [1], [0, 0, 1, 1], [], []>} : vector<32x64xbf16>, vector<64x128xbf16>, vector<32x128xf32> -> vector<32x128xf32>
    %c0_3 = arith.constant 0 : index
    %c0_4 = arith.constant 0 : index
    %3 = vector.load %arg3[%c0_3, %c0_4] : memref<1x128xf32, #tpu.memory_space<vmem>>, vector<1x128xf32>
    %4 = vector.broadcast %3 : vector<1x128xf32> to vector<32x128xf32>
    %5 = arith.addf %2, %4 : vector<32x128xf32>
    %c0_5 = arith.constant 0 : index
    %c0_6 = arith.constant 0 : index
    %6 = vector.load %arg4[%c0_5, %c0_6] : memref<32x128xf32, #tpu.memory_space<vmem>>, vector<32x128xf32>
    tpu.vector_store %arg4[%c0_5, %c0_6], %5 {strides = array<i32>} : memref<32x128xf32, #tpu.memory_space<vmem>>, vector<32x128xf32>,
    return
  }
  func.func @transform_0(%arg0: i32) -> (i32, i32) {
    %c0_i32 = arith.constant 0 : i32
    %c0_i32_0 = arith.constant 0 : i32
    return %arg0, %c0_i32 : i32, i32
  }
  func.func @transform_1(%arg0: i32) -> (i32, i32) {
    %c0_i32 = arith.constant 0 : i32
    %c0_i32_0 = arith.constant 0 : i32
    %c0_i32_1 = arith.constant 0 : i32
    return %c0_i32, %c0_i32_0 : i32, i32
  }
  func.func @transform_2(%arg0: i32) -> (i32, i32) {
    %c0_i32 = arith.constant 0 : i32
    %c0_i32_0 = arith.constant 0 : i32
    %c0_i32_1 = arith.constant 0 : i32
    return %c0_i32, %c0_i32_0 : i32, i32
  }
  func.func @transform_3(%arg0: i32) -> (i32, i32) {
    %c0_i32 = arith.constant 0 : i32
    %c0_i32_0 = arith.constant 0 : i32
    return %arg0, %c0_i32 : i32, i32
  }
}

</mosaic_0001>

<llo_original>
// kernel: patch_embed_forward.1
$region0: #{patch_embed_forward.1}
  #allocation0 [shape = 'u32[]', space=smem, size = 0x4, offset = 0x4, fixed_abs, tag = 'smem constant byte address 0x4 - core index']
  #allocation1 [shape = 'u32[144,128]{1,0:T(1,128)}', space=vmem, size = 0x12000, scoped, tag = 'internal scratch']
  %s0 = inlined_call_operand.vmem [shape: bf16[32,64], index: 0, kind: input, shape index: {}]
  %s1 = inlined_call_operand.vmem [shape: bf16[64,128], index: 1, kind: input, shape index: {}]
  %s2 = inlined_call_operand.vmem [shape: f32[1,128], index: 2, kind: input, shape index: {}]
  %s3 = inlined_call_operand.hbm [shape: f32[32,128], index: 3, kind: output, shape index: {}]
  %s4 = sld [smem:[#allocation0]]
  $region22: #{patch_embed_forward.1} parent=0
    _
  %s6 = ssub.s32 1, %s4
  %s7 = scalar_select 0, %s6, %s4
  $region1: #{patch_embed_forward.1} parent=0
    #allocation2 [shape = 'u8[16384]{0}', space=vmem, size = 0x4000, scoped, tag = 'output window, operand 0, single buffered']
    #allocation3 [shape = 's32[1]{0}', space=sflag, size = 0x4, scoped, tag = 'scoped memory for patch_embed_forward.1']
    %8 = vsyncpa [#allocation3], 0
    // Predicated region
    $region2: #{patch_embed_forward.1} parent=1 // pred_check
      _
    $region3: #{patch_embed_forward.1} parent=1 // pred_check_branch
      %10 = sbr.rel (0) target = $region5
    $region4: #{patch_embed_forward.1} parent=1 // pred_region
      _
    $region5: #{patch_embed_forward.1} parent=1 // pred_fallthru
      _
    // Predicated region
    $region6: #{patch_embed_forward.1} parent=1 // pred_check
      _
    $region7: #{patch_embed_forward.1} parent=1 // pred_check_branch
      %12 = sbr.rel (0) target = $region9
    $region8: #{patch_embed_forward.1} parent=1 // pred_region
      _
    $region9: #{patch_embed_forward.1} parent=1 // pred_fallthru
      _
    // Predicated region
    $region10: #{patch_embed_forward.1} parent=1 // pred_check
      _
    $region11: #{patch_embed_forward.1} parent=1 // pred_check_branch
      %14 = sbr.rel (0) target = $region13
    $region12: #{patch_embed_forward.1} parent=1 // pred_region
      _
    $region13: #{patch_embed_forward.1} parent=1 // pred_fallthru
      _
    %v16 = vld [vmem:[%s0] sm:$0xf]
    %v17 = vld [vmem:[%s0 + $0x4] sm:$0xf]
    %v18 = vld [vmem:[%s0 + $0x8] sm:$0xf]
    %v19 = vld [vmem:[%s0 + $0xc] sm:$0xf]
    %v20 = vld [vmem:[%s1] sm:$0xf]
    %v21 = vld [vmem:[%s1 + $0x4] sm:$0xf]
    %v22 = vld [vmem:[%s1 + $0x8] sm:$0xf]
    %v23 = vld [vmem:[%s1 + $0xc] sm:$0xf]
    %v24 = vld [vmem:[%s1 + $0x10] sm:$0xf]
    %v25 = vld [vmem:[%s1 + $0x14] sm:$0xf]
    %v26 = vld [vmem:[%s1 + $0x18] sm:$0xf]
    %v27 = vld [vmem:[%s1 + $0x1c] sm:$0xf]
    %v28 = vld [vmem:[%s2] sm:$0x1]
    %v30 = vlaneseq
    %v31 = vshrl.u32 %v30, 7
    %v32 = vsub.s32 0, %v31
    %v33 = vrot.slane %v28, %v32
    %v39 = vunpack.c.l.b16 %v16
    %v40 = vunpack.c.l.b16 %v17
    %v41 = vunpack.c.l.b16 %v18
    %v42 = vunpack.c.l.b16 %v19
    %v43 = vpack.c.b16 %v40, %v39
    %v44 = vpack.c.b16 %v42, %v41
    %v53 = vunpack.c.l.b16 %v20
    %v54 = vunpack.c.l.b16 %v21
    %v55 = vunpack.c.l.b16 %v22
    %v56 = vunpack.c.l.b16 %v23
    %v57 = vunpack.c.l.b16 %v24
    %v58 = vunpack.c.l.b16 %v25
    %v59 = vunpack.c.l.b16 %v26
    %v60 = vunpack.c.l.b16 %v27
    %v61 = vpack.c.b16 %v54, %v53
    %v62 = vpack.c.b16 %v56, %v55
    %v63 = vpack.c.b16 %v58, %v57
    %v64 = vpack.c.b16 %v60, %v59
    %vm69 = vcmask 523264
    %v71 = vsel %vm69, %v43, 0
    %v74 = vsel %vm69, %v44, 0
    %76 = vmatprep.subr.bf16.mxu0 0
    %77 = vmatpush1.bf16.msra.mxu0 %v61
    %78 = vmatprep.subr.bf16.mxu0 0
    %79 = vmatpush1.bf16.msra.mxu0 %v62
    %80 = vmatprep.subr.bf16.mxu0 0
    %81 = vmatpush1.bf16.msra.mxu0 %v63
    %82 = vmatprep.subr.bf16.mxu0 0
    %83 = vmatpush1.bf16.msra.mxu0 %v64
    %84 = vmatprep.subr.bf16.mxu0 0
    %85 = vmatpush1.bf16.msra.mxu0 0
    %86 = vmatprep.subr.bf16.mxu0 0
    %87 = vmatpush1.bf16.msra.mxu0 0
    %88 = vmatprep.subr.bf16.mxu0 0
    %89 = vmatpush1.bf16.msra.mxu0 0
    %90 = vmatprep.subr.bf16.mxu0 0
    %91 = vmatpush1.bf16.msra.mxu0 0
    %92 = vmatprep.subr.bf16.mxu0 0
    %93 = vmatpush1.bf16.msra.mxu0 0
    %94 = vmatprep.subr.bf16.mxu0 0
    %95 = vmatpush1.bf16.msra.mxu0 0
    %96 = vmatprep.subr.bf16.mxu0 0
    %97 = vmatpush1.bf16.msra.mxu0 0
    %98 = vmatprep.subr.bf16.mxu0 0
    %99 = vmatpush1.bf16.msra.mxu0 0
    %100 = vmatprep.subr.bf16.mxu0 0
    %101 = vmatpush1.bf16.msra.mxu0 0
    %102 = vmatprep.subr.bf16.mxu0 0
    %103 = vmatpush1.bf16.msra.mxu0 0
    %104 = vmatprep.subr.bf16.mxu0 0
    %105 = vmatpush1.bf16.msra.mxu0 0
    %106 = vmatprep.subr.bf16.mxu0 0
    %107 = vmatpush1.bf16.msra.mxu0 0
    %108 = vmatprep.mubr.bf16.mxu0 0
    %109 = vmatmul.mubr.bf16.gmra.mrb[0].mxu0 %v71
    %v110 = vpop.f32.mrb[0].mxu0
    %v111 = vadd.f32 %v33, %v110
    %v112 = vpop.f32.mrb[0].mxu0
    %v113 = vpop.f32.mrb[0].mxu0
    %v114 = vadd.f32 %v33, %v113
    %v115 = vpop.f32.mrb[0].mxu0
    %116 = vmatprep.mubr.bf16.mxu0 0
    %117 = vmatmul.mubr.bf16.gmra.mrb[0].mxu0 %v74
    %v118 = vpop.f32.mrb[0].mxu0
    %v119 = vadd.f32 %v33, %v118
    %v120 = vpop.f32.mrb[0].mxu0
    %v121 = vpop.f32.mrb[0].mxu0
    %v122 = vadd.f32 %v33, %v121
    %v123 = vpop.f32.mrb[0].mxu0
    %124 = vdwg.mxu0
    %125 = vst [vmem:[#allocation2] sm:$0xff] %v111
    %126 = vst [vmem:[#allocation2 + $0x8] sm:$0xff] %v114
    %127 = vst [vmem:[#allocation2 + $0x10] sm:$0xff] %v119
    %128 = vst [vmem:[#allocation2 + $0x18] sm:$0xff] %v122
    // Predicated region
    $region14: #{patch_embed_forward.1} parent=1 // pred_check
      _
    $region15: #{patch_embed_forward.1} parent=1 // pred_check_branch
      %130 = sbr.rel (0) target = $region17
    $region16: #{patch_embed_forward.1} parent=1 // pred_region
      %s132 = ssub.s32 512, 512
      %133 = vsyncadd [#allocation3], %s132
      %s134 = sshll.u32 [#allocation2], 4
      %s135 = int_to_ptr.vmem [resolvable:$true] %s134
      %140 = dma.vmem_to_hbm [thread:$0]  %s135, 512, %s3, [#allocation3], 128, 128, 8
    $region17: #{patch_embed_forward.1} parent=1 // pred_fallthru
      _
    // Predicated region
    $region18: #{patch_embed_forward.1} parent=1 // pred_check
      _
    $region19: #{patch_embed_forward.1} parent=1 // pred_check_branch
      %142 = sbr.rel (0) target = $region21
    $region20: #{patch_embed_forward.1} parent=1 // pred_region
      %143 = dma.done [#allocation3], 512
    $region21: #{patch_embed_forward.1} parent=1 // pred_fallthru
      _
    %144 = vsyncpa [#allocation3], 1

</llo_original>
